<compile_context>
chip_gen: v5e
topology: v5e:2x2
jax: 0.10.0
libtpu: 0.0.40
codegen_flags: <defaults>
</compile_context>

<pallas_src>
import jax
import jax.numpy as jnp
from jax.experimental import pallas as pl
from jax.experimental.pallas import tpu as pltpu


def attn_general_kernel(hidden_ref, enc_ref, w_ref, out_ref):
    """One batch-tile of seq2seq 'general' attention.

    hidden_ref: (Bt, H)    decoder hidden state tile
    enc_ref:    (Bt, L, H) encoder outputs tile
    w_ref:      (H, H)     nn.Linear weight, (out_features, in_features) layout
    out_ref:    (Bt, L)    softmax attention weights over the sequence axis
    """
    hidden = hidden_ref[...]                          # (Bt, H)
    enc = enc_ref[...]                                # (Bt, L, H)
    w = w_ref[...]                                    # (H_out, H_in)

    # scores[b,l] = hidden[b]^T W enc[b,l]  ==  sum_h enc[b,l,h] * v[b,h]
    # with v[b,h] = sum_o hidden[b,o] * W[o,h]  ->  v = hidden @ W  (no transpose).
    # The Linear bias contributes hidden[b].bias, constant over l, so the
    # softmax cancels it exactly and it is omitted entirely.
    v = jnp.dot(hidden, w, preferred_element_type=jnp.float32)    # (Bt, H), MXU

    # VPU multiply + lane reduce; never materializes a (Bt, L, H) energy tensor
    # beyond the single elementwise product, and keeps the tiny batched matvec
    # off the MXU (push/drain latency >> work at these widths).
    scores = jnp.sum(enc * v[:, None, :], axis=-1)                # (Bt, L)

    # Numerically-safe softmax over L; reciprocal runs on the otherwise-idle EUP.
    m = jnp.max(scores, axis=-1, keepdims=True)
    e = jnp.exp(scores - m)
    denom = jnp.sum(e, axis=-1, keepdims=True)
    out_ref[...] = (e * pl.reciprocal(denom, approx=True)).astype(out_ref.dtype)


def attn_forward(hidden, encoder_outputs, w, b, *, batch_tile=None):
    """Pallas forward for Attn(method='general').

    hidden:          (B, H)    float32
    encoder_outputs: (B, L, H) float32
    w:               (H, H)    nn.Linear weight (out_features, in_features)
    b:               (H,)      nn.Linear bias (softmax-invariant -> not used)
    returns:         (B, L)    attention weights (softmax over L)
    """
    del b  # bias adds a per-row constant to the scores; softmax cancels it.
    B, L, H = encoder_outputs.shape
    if batch_tile is None:
        batch_tile = B          # small shapes: one whole-array block per tensor
    assert B % batch_tile == 0, "batch_tile must divide B"
    grid = (B // batch_tile,)

    return pl.pallas_call(
        attn_general_kernel,
        out_shape=jax.ShapeDtypeStruct((B, L), jnp.float32),
        grid=grid,
        in_specs=[
            pl.BlockSpec((batch_tile, H), lambda i: (i, 0)),        # hidden
            pl.BlockSpec((batch_tile, L, H), lambda i: (i, 0, 0)),  # encoder_outputs
            pl.BlockSpec((H, H), lambda i: (0, 0)),                 # W (reused per tile)
        ],
        out_specs=pl.BlockSpec((batch_tile, L), lambda i: (i, 0)),
        compiler_params=pltpu.CompilerParams(
            # Batch axis is independent -> shard across v7x's 2 TensorCores;
            # harmless on single-TC v5e/v6e.
            dimension_semantics=("parallel",),
        ),
    )(hidden, encoder_outputs, w)
    # TODO(synk): for production L (softmax axis >> VMEM) this needs an online
    # softmax over L tiles; at the module's shapes a single L block suffices.


if __name__ == "__main__":
    B, L, H = 2, 8, 32  # small shapes consistent with the module's forward

    key = jax.random.PRNGKey(0)
    k1, k2, k3, k4 = jax.random.split(key, 4)

    hidden = jax.random.normal(k1, (B, H), dtype=jnp.float32)
    encoder_outputs = jax.random.normal(k2, (B, L, H), dtype=jnp.float32)
    # Deterministic init of nn.Linear(hidden_size, hidden_size) params
    w = jax.random.normal(k3, (H, H), dtype=jnp.float32) * (1.0 / jnp.sqrt(H))
    b = jax.random.normal(k4, (H,), dtype=jnp.float32) * 0.01

    out = attn_forward(hidden, encoder_outputs, w, b)
    jax.block_until_ready(out)

    # Pure-JAX reference, computed exactly as nn.Linear + bmm + softmax would.
    energy = jnp.einsum("blh,oh->blo", encoder_outputs, w) + b
    scores = jnp.einsum("blh,bh->bl", energy, hidden)
    ref = jax.nn.softmax(scores, axis=1)
    # Slightly loose tolerance: kernel drops the softmax-invariant bias and uses
    # the EUP approximate reciprocal in the softmax epilogue.
    assert jnp.allclose(out, ref, atol=2e-3, rtol=2e-3), "mismatch vs reference"

    print("KERNEL_OK")
</pallas_src>

<mosaic_0001>
module attributes {stable_mosaic.version = 11 : i64} {
  func.func @attn_general_kernel(%arg0: i32, %arg1: memref<2x32xf32, #tpu.memory_space<vmem>>, %arg2: memref<2x8x32xf32, #tpu.memory_space<vmem>>, %arg3: memref<32x32xf32, #tpu.memory_space<vmem>>, %arg4: memref<2x8xf32, #tpu.memory_space<vmem>>) attributes {dimension_semantics = [#tpu.dimension_semantics<parallel>], iteration_bounds = array<i64: 1>, scalar_prefetch = 0 : i64, scratch_operands = 0 : i64, tpu.core_type = #tpu.core_type<tc>, window_params = [{transform_indices = @transform_0, window_bounds = array<i64: 2, 32>}, {transform_indices = @transform_1, window_bounds = array<i64: 2, 8, 32>}, {pipeline_mode = #tpu.pipeline_mode<synchronous>, transform_indices = @transform_2, window_bounds = array<i64: 32, 32>}, {transform_indices = @transform_3, window_bounds = array<i64: 2, 8>}]} {
    %c0 = arith.constant 0 : index
    %c0_0 = arith.constant 0 : index
    %0 = vector.load %arg1[%c0, %c0_0] : memref<2x32xf32, #tpu.memory_space<vmem>>, vector<2x32xf32>
    %c0_1 = arith.constant 0 : index
    %c0_2 = arith.constant 0 : index
    %c0_3 = arith.constant 0 : index
    %1 = vector.load %arg2[%c0_1, %c0_2, %c0_3] : memref<2x8x32xf32, #tpu.memory_space<vmem>>, vector<2x8x32xf32>
    %c0_4 = arith.constant 0 : index
    %c0_5 = arith.constant 0 : index
    %2 = vector.load %arg3[%c0_4, %c0_5] : memref<32x32xf32, #tpu.memory_space<vmem>>, vector<32x32xf32>
    %cst = arith.constant dense<0.000000e+00> : vector<2x32xf32>
    %3 = tpu.matmul %0, %2, %cst {dimension_numbers = #tpu.dot_dimension_numbers<[1], [0], [0], [1], [0, 0, 1, 1], [], []>} : vector<2x32xf32>, vector<32x32xf32>, vector<2x32xf32> -> vector<2x32xf32>
    %4 = vector.shape_cast %3 : vector<2x32xf32> to vector<2x1x32xf32>
    %5 = vector.broadcast %4 : vector<2x1x32xf32> to vector<2x8x32xf32>
    %6 = arith.mulf %1, %5 : vector<2x8x32xf32>
    %cst_6 = arith.constant dense<0.000000e+00> : vector<2x8xf32>
    %7 = vector.multi_reduction <add>, %6, %cst_6 [2] : vector<2x8x32xf32> to vector<2x8xf32>
    %cst_7 = arith.constant dense<0xFF800000> : vector<2xf32>
    %8 = vector.multi_reduction <maximumf>, %7, %cst_7 [1] : vector<2x8xf32> to vector<2xf32>
    %9 = vector.shape_cast %8 : vector<2xf32> to vector<2x1xf32>
    %10 = vector.broadcast %9 : vector<2x1xf32> to vector<2x8xf32>
    %11 = arith.subf %7, %10 : vector<2x8xf32>
    %12 = math.exp %11 : vector<2x8xf32>
    %cst_8 = arith.constant dense<0.000000e+00> : vector<2xf32>
    %13 = vector.multi_reduction <add>, %12, %cst_8 [1] : vector<2x8xf32> to vector<2xf32>
    %14 = vector.shape_cast %13 : vector<2xf32> to vector<2x1xf32>
    %15 = tpu.reciprocal %14 {approx = true} : vector<2x1xf32> -> vector<2x1xf32>
    %16 = vector.broadcast %15 : vector<2x1xf32> to vector<2x8xf32>
    %17 = arith.mulf %12, %16 : vector<2x8xf32>
    %c0_9 = arith.constant 0 : index
    %c0_10 = arith.constant 0 : index
    %18 = vector.load %arg4[%c0_9, %c0_10] : memref<2x8xf32, #tpu.memory_space<vmem>>, vector<2x8xf32>
    tpu.vector_store %arg4[%c0_9, %c0_10], %17 {strides = array<i32>} : memref<2x8xf32, #tpu.memory_space<vmem>>, vector<2x8xf32>,
    return
  }
  func.func @transform_0(%arg0: i32) -> (i32, i32) {
    %c0_i32 = arith.constant 0 : i32
    %c0_i32_0 = arith.constant 0 : i32
    return %arg0, %c0_i32 : i32, i32
  }
  func.func @transform_1(%arg0: i32) -> (i32, i32, i32) {
    %c0_i32 = arith.constant 0 : i32
    %c0_i32_0 = arith.constant 0 : i32
    %c0_i32_1 = arith.constant 0 : i32
    return %arg0, %c0_i32, %c0_i32_0 : i32, i32, i32
  }
  func.func @transform_2(%arg0: i32) -> (i32, i32) {
    %c0_i32 = arith.constant 0 : i32
    %c0_i32_0 = arith.constant 0 : i32
    %c0_i32_1 = arith.constant 0 : i32
    return %c0_i32, %c0_i32_0 : i32, i32
  }
  func.func @transform_3(%arg0: i32) -> (i32, i32) {
    %c0_i32 = arith.constant 0 : i32
    %c0_i32_0 = arith.constant 0 : i32
    return %arg0, %c0_i32 : i32, i32
  }
}

</mosaic_0001>

<llo_original>
// kernel: tpu_custom_call.1
$region0: #{tpu_custom_call.1}
  #allocation0 [shape = 'u32[]', space=smem, size = 0x4, offset = 0x4, fixed_abs, tag = 'smem constant byte address 0x4 - core index']
  #allocation1 [shape = 'u32[72,128]{1,0:T(1,128)}', space=vmem, size = 0x9000, scoped, tag = 'internal scratch']
  %s0 = inlined_call_operand.hbm [shape: f32[2,32], index: 0, kind: input, shape index: {}]
  %s1 = inlined_call_operand.hbm [shape: f32[2,8,32], index: 1, kind: input, shape index: {}]
  %s2 = inlined_call_operand.hbm [shape: f32[32,32], index: 2, kind: input, shape index: {}]
  %s3 = inlined_call_operand.hbm [shape: f32[2,8], index: 3, kind: output, shape index: {}]
  %s4 = sld [smem:[#allocation0]]
  $region34: #{tpu_custom_call.1} parent=0
    _
  %s6 = ssub.s32 1, %s4
  %s7 = scalar_select 0, %s6, %s4
  $region1: #{tpu_custom_call.1} parent=0
    #allocation2 [shape = 'u8[1024]{0}', space=vmem, size = 0x400, scoped, tag = 'input window, operand 0, single buffered']
    #allocation3 [shape = 's32[1]{0}', space=sflag, size = 0x4, scoped, tag = 'scoped memory for tpu_custom_call.1']
    #allocation4 [shape = 's32[1]{0}', space=sflag, size = 0x4, scoped, tag = 'scoped memory for tpu_custom_call.1']
    #allocation5 [shape = 'u8[8192]{0}', space=vmem, size = 0x2000, scoped, tag = 'input window, operand 1, single buffered']
    #allocation6 [shape = 's32[1]{0}', space=sflag, size = 0x4, scoped, tag = 'scoped memory for tpu_custom_call.1']
    #allocation7 [shape = 'u8[16384]{0}', space=vmem, size = 0x4000, scoped, tag = 'input window, operand 2, single buffered']
    #allocation8 [shape = 'u8[1024]{0}', space=vmem, size = 0x400, scoped, tag = 'output window, operand 0, single buffered']
    %8 = vsyncpa [#allocation3], 0
    %9 = vsyncpa [#allocation6], 0
    %10 = vsyncpa [#allocation4], 0
    // Predicated region
    $region2: #{tpu_custom_call.1} parent=1 // pred_check
      _
    $region3: #{tpu_custom_call.1} parent=1 // pred_check_branch
      %12 = sbr.rel (0) target = $region5
    $region4: #{tpu_custom_call.1} parent=1 // pred_region
      %14 = vsyncadd [#allocation3], 0
      %s16 = sshll.u32 %s0, 4
      %s17 = int_to_ptr.hbm [resolvable:$true] %s16
      %s18 = sshll.u32 [#allocation2], 4
      %s19 = int_to_ptr.vmem [resolvable:$true] %s18
      %21 = dma.hbm_to_vmem [thread:$0]  %s17, 32, %s19, [#allocation3]
    $region5: #{tpu_custom_call.1} parent=1 // pred_fallthru
      _
    // Predicated region
    $region6: #{tpu_custom_call.1} parent=1 // pred_check
      _
    $region7: #{tpu_custom_call.1} parent=1 // pred_check_branch
      %23 = sbr.rel (0) target = $region9
    $region8: #{tpu_custom_call.1} parent=1 // pred_region
      %25 = vsyncadd [#allocation6], 0
      %s26 = sshll.u32 %s1, 4
      %s27 = int_to_ptr.hbm [resolvable:$true] %s26
      %s28 = sshll.u32 [#allocation5], 4
      %s29 = int_to_ptr.vmem [resolvable:$true] %s28
      %34 = dma.hbm_to_vmem [thread:$0]  %s27, 256, %s29, [#allocation6], 128, 128, 8
    $region9: #{tpu_custom_call.1} parent=1 // pred_fallthru
      _
    // Predicated region
    $region10: #{tpu_custom_call.1} parent=1 // pred_check
      _
    $region11: #{tpu_custom_call.1} parent=1 // pred_check_branch
      %36 = sbr.rel (0) target = $region13
    $region12: #{tpu_custom_call.1} parent=1 // pred_region
      %38 = vsyncadd [#allocation6], 0
      %s39 = sshll.u32 %s2, 4
      %s40 = int_to_ptr.hbm [resolvable:$true] %s39
      %s41 = sshll.u32 [#allocation7], 4
      %s42 = int_to_ptr.vmem [resolvable:$true] %s41
      %47 = dma.hbm_to_vmem [thread:$0]  %s40, 512, %s42, [#allocation6], 128, 128, 8
    $region13: #{tpu_custom_call.1} parent=1 // pred_fallthru
      _
    // Predicated region
    $region14: #{tpu_custom_call.1} parent=1 // pred_check
      _
    $region15: #{tpu_custom_call.1} parent=1 // pred_check_branch
      %49 = sbr.rel (0) target = $region17
    $region16: #{tpu_custom_call.1} parent=1 // pred_region
      %51 = dma.done [#allocation3], 32
    $region17: #{tpu_custom_call.1} parent=1 // pred_fallthru
      _
    // Predicated region
    $region18: #{tpu_custom_call.1} parent=1 // pred_check
      _
    $region19: #{tpu_custom_call.1} parent=1 // pred_check_branch
      %53 = sbr.rel (0) target = $region21
    $region20: #{tpu_custom_call.1} parent=1 // pred_region
      %55 = dma.done [#allocation6], 256
    $region21: #{tpu_custom_call.1} parent=1 // pred_fallthru
      _
    // Predicated region
    $region22: #{tpu_custom_call.1} parent=1 // pred_check
      _
    $region23: #{tpu_custom_call.1} parent=1 // pred_check_branch
      %57 = sbr.rel (0) target = $region25
    $region24: #{tpu_custom_call.1} parent=1 // pred_region
      %59 = dma.done [#allocation6], 512
    $region25: #{tpu_custom_call.1} parent=1 // pred_fallthru
      _
    %v60 = vld [vmem:[#allocation2] sm:$0x3]
    %v61 = vld [vmem:[#allocation5] sm:$0xff]
    %v62 = vld [vmem:[#allocation5 + $0x8] sm:$0xff]
    %v63 = vld [vmem:[#allocation7] sm:$0xff]
    %v64 = vld [vmem:[#allocation7 + $0x8] sm:$0xff]
    %v65 = vld [vmem:[#allocation7 + $0x10] sm:$0xff]
    %v66 = vld [vmem:[#allocation7 + $0x18] sm:$0xff]
    %vm67 = vcmask 261120
    %v69 = vsel %vm67, %v60, 0
    %71 = vmatpush.msra.mxu0 0.0
    %72 = vmatpush.msra.mxu0 0.0
    %73 = vmatpush.msra.mxu0 0.0
    %74 = vmatpush.msra.mxu0 0.0
    %75 = vmatpush.msra.mxu0 0.0
    %76 = vmatpush.msra.mxu0 0.0
    %77 = vmatpush.msra.mxu0 0.0
    %78 = vmatpush.msra.mxu0 0.0
    %79 = vmatpush.msra.mxu0 0.0
    %80 = vmatpush.msra.mxu0 0.0
    %81 = vmatpush.msra.mxu0 0.0
    %82 = vmatpush.msra.mxu0 0.0
    %83 = vmatpush.msra.mxu0 %v66
    %84 = vmatpush.msra.mxu0 %v65
    %85 = vmatpush.msra.mxu0 %v64
    %86 = vmatpush.msra.mxu0 %v63
    %87 = vmatmul.f32.gmra.mxu0 %v69
    %v88 = vpop.f32.mrf.mxu0
    %v89 = vadd.f32 0.0, %v88
    %90 = vdwg.mxu0
    %v92 = vrot.slane %v89, 1
    %v93 = vperm.slane %v89, 0
    %v94 = vperm.slane %v92, 0
    %v97 = vmul.f32 %v61, %v93
    %v98 = vmul.f32 %v62, %v94
    %v99 = vsel %vm67, %v97, 0.0
    %100 = vadd.xlane.f32.xlu0 %v99
    %v101 = vpop.xlane.xlu0 %100
    %v102 = vsel %vm67, %v98, 0.0
    %103 = vadd.xlane.f32.xlu0 %v102
    %v104 = vpop.xlane.xlu0 %103
    %v107 = vlaneseq
    %v108 = vand.u32 %v107, 127
    %v109 = vperm.slane %v101, %v108
    %v110 = vperm.slane %v104, %v108
    %vm111 = vcmask 1041409
    %v112 = vsel %vm111, %v110, %v109
    %vm114 = vcmask 58368
    %v115 = vsel %vm114, %v112, -inf
    %116 = vmax.xlane.f32.xlu0 %v115
    %v117 = vpop.xlane.xlu0 %116
    %v119 = vperm.slane %v117, 0
    %v120 = vperm.slane %v117, 1
    %v123 = vsub.f32 %v101, %v119
    %v124 = vsub.f32 %v104, %v120
    %v125 = vmul.f32 %v123, 1.442695
    %v126 = vpow.pop %v125
    %v127 = vmul.f32 %v124, 1.442695
    %v128 = vpow.pop %v127
    %131 = vset.pattern.permute.xlu0 0
    %132 = vperm.xlu0 %131, %v126
    %v133 = vpop.permute.xlu0 %132
    %134 = vset.pattern.permute.xlu0 0
    %135 = vperm.xlu0 %134, %v128
    %v136 = vpop.permute.xlu0 %135
    %v137 = vperm.slane %v133, %v108
    %v138 = vperm.slane %v136, %v108
    %v139 = vsel %vm111, %v138, %v137
    %v141 = vsel %vm114, %v139, 0.0
    %142 = vadd.xlane.f32.xlu0 %v141
    %v143 = vpop.xlane.xlu0 %142
    %v144 = vrcp.pop %v143
    %v146 = vperm.slane %v144, 0
    %v147 = vperm.slane %v144, 1
    %v150 = vmul.f32 %v126, %v146
    %v151 = vmul.f32 %v128, %v147
    %154 = vset.pattern.permute.xlu0 0
    %155 = vperm.xlu0 %154, %v150
    %v156 = vpop.permute.xlu0 %155
    %157 = vset.pattern.permute.xlu0 0
    %158 = vperm.xlu0 %157, %v151
    %v159 = vpop.permute.xlu0 %158
    %v160 = vperm.slane %v156, %v108
    %v161 = vperm.slane %v159, %v108
    %v162 = vsel %vm111, %v161, %v160
    %164 = vst.msk [vmem:[#allocation8] sm:$0x3] %vm114, %v162
    // Predicated region
    $region26: #{tpu_custom_call.1} parent=1 // pred_check
      _
    $region27: #{tpu_custom_call.1} parent=1 // pred_check_branch
      %166 = sbr.rel (0) target = $region29
    $region28: #{tpu_custom_call.1} parent=1 // pred_region
      %168 = vsyncadd [#allocation4], 0
      %s170 = sshll.u32 [#allocation8], 4
      %s171 = int_to_ptr.vmem [resolvable:$true] %s170
      %s172 = sshll.u32 %s3, 4
      %s173 = int_to_ptr.hbm [resolvable:$true] %s172
      %175 = dma.vmem_to_hbm [thread:$0]  %s171, 32, %s173, [#allocation4]
    $region29: #{tpu_custom_call.1} parent=1 // pred_fallthru
      _
    // Predicated region
    $region30: #{tpu_custom_call.1} parent=1 // pred_check
      _
    $region31: #{tpu_custom_call.1} parent=1 // pred_check_branch
      %177 = sbr.rel (0) target = $region33
    $region32: #{tpu_custom_call.1} parent=1 // pred_region
      %179 = dma.done [#allocation4], 32
    $region33: #{tpu_custom_call.1} parent=1 // pred_fallthru
      _
    %180 = vsyncpa [#allocation3], 1
    %181 = vsyncpa [#allocation6], 1
    %182 = vsyncpa [#allocation4], 1

</llo_original>
